<compile_context>
chip_gen: v7x
topology: tpu7x:2x2x1
jax: 0.10.0
libtpu: 0.0.40
codegen_flags: <defaults>
</compile_context>

<pallas_src>
import functools

import jax
import jax.numpy as jnp
from jax.experimental import pallas as pl
from jax.experimental.pallas import tpu as pltpu


def _round_up(x, m):
    return ((x + m - 1) // m) * m


def _pick_tile(batch, block_rows):
    """Batch-tile rows: multiple of 128, capped at block_rows, and split into
    >= 2 grid steps when there is enough work (v7x megacore)."""
    cap = _round_up(max(block_rows, 128), 128)
    if batch > 2 * 128:
        tb = _round_up(-(-batch // 2), 128)   # ceil(B/2) -> at least 2 tiles
    else:
        tb = _round_up(max(batch, 1), 128)
    return min(cap, tb)


def _cem_mlp_kernel(xo_ref, xa_ref, w1o_ref, w1a_ref, b1_ref, w2_ref, b2_ref,
                    w3_ref, b3_ref, q_ref):
    """Fused 3-layer MLP tile: relu(fc1) -> relu(fc2) -> fc3 (VPU reduction)."""
    # fc1: split-weight matmul replaces the wrapper-side concat.
    # Weights arrive pre-cast to bf16; activations cast per tile (no-op if the
    # caller already supplies bf16 inputs).
    xo = xo_ref[...].astype(jnp.bfloat16)                  # (TB, obs_dim)
    xa = xa_ref[...].astype(jnp.bfloat16)                  # (TB, n_actions)
    h1 = (jnp.dot(xo, w1o_ref[...], preferred_element_type=jnp.float32)
          + jnp.dot(xa, w1a_ref[...], preferred_element_type=jnp.float32)
          + b1_ref[...])                                   # (TB, H) f32
    h1 = jnp.maximum(h1, 0.0)

    # fc2
    h2 = jnp.dot(h1.astype(jnp.bfloat16), w2_ref[...],
                 preferred_element_type=jnp.float32) + b2_ref[...]
    h2 = jnp.maximum(h2, 0.0)                              # (TB, H) f32

    # fc3: H->1 as a VPU multiply + lane reduction (no N=1 MXU pass), written
    # lane-dense with the batch tile on the lane axis; b3 is an SMEM scalar.
    q = jnp.sum(h2 * w3_ref[...], axis=-1)                 # (TB,) f32
    q_ref[...] = (q[None, :] + b3_ref[0]).astype(q_ref.dtype)   # (1, TB)


def _xla_forward(x_obs, x_act, params):
    """Tiny-batch fallback: plain fused XLA MLP with the same precision."""
    w1, b1, w2, b2, w3, b3 = params
    x = jnp.concatenate([x_obs, x_act], axis=-1)
    h1 = jnp.maximum(
        jnp.dot(x.astype(jnp.bfloat16), w1.astype(jnp.bfloat16),
                preferred_element_type=jnp.float32) + b1, 0.0)
    h2 = jnp.maximum(
        jnp.dot(h1.astype(jnp.bfloat16), w2.astype(jnp.bfloat16),
                preferred_element_type=jnp.float32) + b2, 0.0)
    return h2 @ w3 + b3


@functools.partial(jax.jit, static_argnames=("block_rows", "min_pallas_rows"))
def cem_agent_forward(inputs, actions, params, block_rows=16384,
                      min_pallas_rows=1024):
    """Wrapper: tiling/padding glue in JAX, all MLP compute in one Pallas kernel."""
    w1, b1, w2, b2, w3, b3 = params
    obs_dim = inputs.shape[-1]
    n_act = actions.shape[-1]
    hidden = w2.shape[0]

    # actions.contiguous().view(-1, n_actions)
    actions_flat = actions.reshape(-1, n_act)
    B = inputs.shape[0]
    assert actions_flat.shape[0] == B, (
        f"flattened actions batch {actions_flat.shape[0]} != inputs batch {B}")

    # Tiny-batch fallback: a single fused XLA MLP beats pallas_call overhead.
    if B < min_pallas_rows:
        return {'Q': _xla_forward(inputs, actions_flat, params)}

    tb = _pick_tile(B, block_rows)
    num_tiles = -(-B // tb)
    b_pad = num_tiles * tb
    if b_pad != B:
        inputs_p = jnp.pad(inputs, ((0, b_pad - B), (0, 0)))
        actions_p = jnp.pad(actions_flat, ((0, b_pad - B), (0, 0)))
    else:
        inputs_p, actions_p = inputs, actions_flat

    # Split fc1 weight so the concat never materializes in HBM; resident MXU
    # weights pre-cast to bf16 once in the wrapper (tiny, amortized over all
    # tiles).  fc3 row and biases stay f32 (VPU math).
    w1_obs = w1[:obs_dim].astype(jnp.bfloat16)     # (obs_dim, H)
    w1_act = w1[obs_dim:].astype(jnp.bfloat16)     # (n_actions, H)
    w2_bf = w2.astype(jnp.bfloat16)                # (H, H)
    w3_row = w3.reshape(1, hidden)                 # (1, H) f32
    b3_s = b3.reshape(1)                           # scalar via SMEM

    const2 = lambda i: (0, 0)
    row_map = lambda i: (i, 0)
    col_map = lambda i: (0, i)

    # Rough per-tile VMEM footprint -> scoped-VMEM limit with headroom
    # (keeps large tiles working on v5e's 16 MiB default).
    act_bytes = tb * (obs_dim * inputs_p.dtype.itemsize
                      + n_act * actions_p.dtype.itemsize)
    vmem_est = (2 * act_bytes            # double-buffered input tiles
                + 2 * tb * 4             # double-buffered output tile
                + tb * hidden * 12       # h1/h2 f32 + bf16 copies
                + 2 * ((obs_dim + n_act + hidden) * hidden * 2
                       + 3 * hidden * 4))
    vmem_limit = max(32 * 1024 * 1024,
                     min(int(1.5 * vmem_est), 64 * 1024 * 1024))

    flops = 2 * b_pad * ((obs_dim + n_act) * hidden + hidden * hidden + hidden)
    param_bytes = sum(int(a.size) * a.dtype.itemsize
                      for a in (w1_obs, w1_act, b1, w2_bf, b2, w3_row, b3_s))
    bytes_accessed = b_pad * act_bytes // tb + b_pad * 4 + param_bytes

    q_row = pl.pallas_call(
        _cem_mlp_kernel,
        out_shape=jax.ShapeDtypeStruct((1, b_pad), jnp.float32),
        grid=(num_tiles,),
        in_specs=[
            pl.BlockSpec((tb, obs_dim), row_map),     # inputs tile
            pl.BlockSpec((tb, n_act), row_map),       # actions tile
            pl.BlockSpec((obs_dim, hidden), const2),  # w1_obs (resident, bf16)
            pl.BlockSpec((n_act, hidden), const2),    # w1_act (resident, bf16)
            pl.BlockSpec((1, hidden), const2),        # b1 (f32)
            pl.BlockSpec((hidden, hidden), const2),   # w2 (resident, bf16)
            pl.BlockSpec((1, hidden), const2),        # b2 (f32)
            pl.BlockSpec((1, hidden), const2),        # w3 row (f32)
            pl.BlockSpec(memory_space=pltpu.MemorySpace.SMEM),  # b3 scalar
        ],
        out_specs=pl.BlockSpec((1, tb), col_map),     # lane-dense q tile
        compiler_params=pltpu.CompilerParams(
            dimension_semantics=("parallel",),
            vmem_limit_bytes=vmem_limit),
        cost_estimate=pl.CostEstimate(
            flops=flops, transcendentals=0, bytes_accessed=bytes_accessed),
    )(inputs_p, actions_p, w1_obs, w1_act, b1, w2_bf, b2, w3_row, b3_s)

    q = q_row.reshape(b_pad, 1)[:B]
    return {'Q': q}


def init_params(key, num_inputs, hidden_size):
    """Deterministic PyTorch-style Linear init: U(-1/sqrt(fan_in), 1/sqrt(fan_in)).

    Weights are stored transposed, i.e. (in_features, out_features)."""
    ks = jax.random.split(key, 6)

    def linear(kw, kb, fan_in, fan_out):
        bound = 1.0 / jnp.sqrt(jnp.float32(fan_in))
        w = jax.random.uniform(kw, (fan_in, fan_out), jnp.float32, -bound, bound)
        b = jax.random.uniform(kb, (1, fan_out), jnp.float32, -bound, bound)
        return w, b

    w1, b1 = linear(ks[0], ks[1], num_inputs, hidden_size)
    w2, b2 = linear(ks[2], ks[3], hidden_size, hidden_size)
    w3, b3 = linear(ks[4], ks[5], hidden_size, 1)
    return (w1, b1, w2, b2, w3, b3)


def reference_forward(inputs, actions, params, match_kernel_precision=True):
    """Pure-JAX reference of the same forward pass (for correctness check)."""
    w1, b1, w2, b2, w3, b3 = params
    x = jnp.concatenate([inputs, actions.reshape(-1, actions.shape[-1])], axis=-1)
    if match_kernel_precision:
        dot = lambda a, b: jnp.dot(a.astype(jnp.bfloat16), b.astype(jnp.bfloat16),
                                   preferred_element_type=jnp.float32)
    else:
        dot = jnp.dot
    h1 = jnp.maximum(dot(x, w1) + b1, 0.0)
    h2 = jnp.maximum(dot(h1, w2) + b2, 0.0)
    return h2 @ w3 + b3


if __name__ == "__main__":
    # Small shapes consistent with the module:
    #   input_shape (obs dim) = 16, n_actions = 4  -> num_inputs = 20
    #   rnn_hidden_dim = 32
    input_shape = 16
    n_actions = 4
    hidden_size = 32

    key = jax.random.PRNGKey(0)
    k_in, k_act, k_par = jax.random.split(key, 3)
    params = init_params(k_par, input_shape + n_actions, hidden_size)

    # 1) Small batch forced through the Pallas kernel (single 128-row tile).
    batch = 8
    inputs = jax.random.normal(k_in, (batch, input_shape), jnp.float32)
    actions = jax.random.normal(k_act, (batch, n_actions), jnp.float32)
    out = cem_agent_forward(inputs, actions, params, min_pallas_rows=0)
    q = jax.block_until_ready(out['Q'])
    assert q.shape == (batch, 1), q.shape
    q_ref_bf16 = reference_forward(inputs, actions, params, match_kernel_precision=True)
    assert jnp.allclose(q, q_ref_bf16, atol=1e-3, rtol=1e-3), "mismatch vs bf16 reference"
    q_ref_f32 = reference_forward(inputs, actions, params, match_kernel_precision=False)
    assert jnp.allclose(q, q_ref_f32, atol=5e-2, rtol=5e-2), "mismatch vs f32 reference"

    # 2) Non-aligned batch: exercises padding and the >=2-tile (megacore) path.
    batch2 = 1000
    k_in2, k_act2 = jax.random.split(jax.random.PRNGKey(1), 2)
    inputs2 = jax.random.normal(k_in2, (batch2, input_shape), jnp.float32)
    actions2 = jax.random.normal(k_act2, (batch2, n_actions), jnp.float32)
    out2 = cem_agent_forward(inputs2, actions2, params, min_pallas_rows=0)
    q2 = jax.block_until_ready(out2['Q'])
    assert q2.shape == (batch2, 1), q2.shape
    q2_ref = reference_forward(inputs2, actions2, params, match_kernel_precision=True)
    assert jnp.allclose(q2, q2_ref, atol=1e-3, rtol=1e-3), "mismatch (multi-tile)"

    # 3) Tiny-batch XLA fallback path (default threshold) agrees with the kernel.
    out_fb = cem_agent_forward(inputs, actions, params)
    q_fb = jax.block_until_ready(out_fb['Q'])
    assert q_fb.shape == (batch, 1), q_fb.shape
    assert jnp.allclose(q, q_fb, atol=1e-3, rtol=1e-3), "fallback/kernel mismatch"

    print("KERNEL_OK")
</pallas_src>

<mosaic_0001>
module attributes {stable_mosaic.version = 11 : i64} {
  func.func @_cem_mlp_kernel(%arg0: i32, %arg1: memref<128x16xf32, #tpu.memory_space<vmem>>, %arg2: memref<128x4xf32, #tpu.memory_space<vmem>>, %arg3: memref<16x32xbf16, #tpu.memory_space<vmem>>, %arg4: memref<4x32xbf16, #tpu.memory_space<vmem>>, %arg5: memref<1x32xf32, #tpu.memory_space<vmem>>, %arg6: memref<32x32xbf16, #tpu.memory_space<vmem>>, %arg7: memref<1x32xf32, #tpu.memory_space<vmem>>, %arg8: memref<1x32xf32, #tpu.memory_space<vmem>>, %arg9: memref<1xf32, #tpu.memory_space<smem>>, %arg10: memref<1x128xf32, #tpu.memory_space<vmem>>) attributes {dimension_semantics = [#tpu.dimension_semantics<parallel>], iteration_bounds = array<i64: 1>, scalar_prefetch = 0 : i64, scratch_operands = 0 : i64, tpu.core_type = #tpu.core_type<tc>, window_params = [{transform_indices = @transform_0, window_bounds = array<i64: 128, 16>}, {transform_indices = @transform_1, window_bounds = array<i64: 128, 4>}, {pipeline_mode = #tpu.pipeline_mode<synchronous>, transform_indices = @transform_2, window_bounds = array<i64: 16, 32>}, {pipeline_mode = #tpu.pipeline_mode<synchronous>, transform_indices = @transform_3, window_bounds = array<i64: 4, 32>}, {pipeline_mode = #tpu.pipeline_mode<synchronous>, transform_indices = @transform_4, window_bounds = array<i64: 1, 32>}, {pipeline_mode = #tpu.pipeline_mode<synchronous>, transform_indices = @transform_5, window_bounds = array<i64: 32, 32>}, {pipeline_mode = #tpu.pipeline_mode<synchronous>, transform_indices = @transform_6, window_bounds = array<i64: 1, 32>}, {pipeline_mode = #tpu.pipeline_mode<synchronous>, transform_indices = @transform_7, window_bounds = array<i64: 1, 32>}, {transform_indices = @transform_8, window_bounds = array<i64: 1>}, {transform_indices = @transform_9, window_bounds = array<i64: 1, 128>}]} {
    %c0 = arith.constant 0 : index
    %c0_0 = arith.constant 0 : index
    %0 = vector.load %arg1[%c0, %c0_0] : memref<128x16xf32, #tpu.memory_space<vmem>>, vector<128x16xf32>
    %1 = arith.truncf %0 : vector<128x16xf32> to vector<128x16xbf16>
    %c0_1 = arith.constant 0 : index
    %c0_2 = arith.constant 0 : index
    %2 = vector.load %arg2[%c0_1, %c0_2] : memref<128x4xf32, #tpu.memory_space<vmem>>, vector<128x4xf32>
    %3 = arith.truncf %2 : vector<128x4xf32> to vector<128x4xbf16>
    %c0_3 = arith.constant 0 : index
    %c0_4 = arith.constant 0 : index
    %4 = vector.load %arg3[%c0_3, %c0_4] : memref<16x32xbf16, #tpu.memory_space<vmem>>, vector<16x32xbf16>
    %cst = arith.constant dense<0.000000e+00> : vector<128x32xf32>
    %5 = tpu.matmul %1, %4, %cst {dimension_numbers = #tpu.dot_dimension_numbers<[1], [0], [0], [1], [0, 0, 1, 1], [], []>} : vector<128x16xbf16>, vector<16x32xbf16>, vector<128x32xf32> -> vector<128x32xf32>
    %c0_5 = arith.constant 0 : index
    %c0_6 = arith.constant 0 : index
    %6 = vector.load %arg4[%c0_5, %c0_6] : memref<4x32xbf16, #tpu.memory_space<vmem>>, vector<4x32xbf16>
    %cst_7 = arith.constant dense<0.000000e+00> : vector<128x32xf32>
    %7 = tpu.matmul %3, %6, %cst_7 {dimension_numbers = #tpu.dot_dimension_numbers<[1], [0], [0], [1], [0, 0, 1, 1], [], []>} : vector<128x4xbf16>, vector<4x32xbf16>, vector<128x32xf32> -> vector<128x32xf32>
    %8 = arith.addf %5, %7 : vector<128x32xf32>
    %c0_8 = arith.constant 0 : index
    %c0_9 = arith.constant 0 : index
    %9 = vector.load %arg5[%c0_8, %c0_9] : memref<1x32xf32, #tpu.memory_space<vmem>>, vector<1x32xf32>
    %10 = vector.broadcast %9 : vector<1x32xf32> to vector<128x32xf32>
    %11 = arith.addf %8, %10 : vector<128x32xf32>
    %cst_10 = arith.constant 0.000000e+00 : f32
    %12 = vector.broadcast %cst_10 : f32 to vector<128x32xf32>
    %13 = arith.maximumf %11, %12 : vector<128x32xf32>
    %14 = arith.truncf %13 : vector<128x32xf32> to vector<128x32xbf16>
    %c0_11 = arith.constant 0 : index
    %c0_12 = arith.constant 0 : index
    %15 = vector.load %arg6[%c0_11, %c0_12] : memref<32x32xbf16, #tpu.memory_space<vmem>>, vector<32x32xbf16>
    %cst_13 = arith.constant dense<0.000000e+00> : vector<128x32xf32>
    %16 = tpu.matmul %14, %15, %cst_13 {dimension_numbers = #tpu.dot_dimension_numbers<[1], [0], [0], [1], [0, 0, 1, 1], [], []>} : vector<128x32xbf16>, vector<32x32xbf16>, vector<128x32xf32> -> vector<128x32xf32>
    %c0_14 = arith.constant 0 : index
    %c0_15 = arith.constant 0 : index
    %17 = vector.load %arg7[%c0_14, %c0_15] : memref<1x32xf32, #tpu.memory_space<vmem>>, vector<1x32xf32>
    %18 = vector.broadcast %17 : vector<1x32xf32> to vector<128x32xf32>
    %19 = arith.addf %16, %18 : vector<128x32xf32>
    %cst_16 = arith.constant 0.000000e+00 : f32
    %20 = vector.broadcast %cst_16 : f32 to vector<128x32xf32>
    %21 = arith.maximumf %19, %20 : vector<128x32xf32>
    %c0_17 = arith.constant 0 : index
    %c0_18 = arith.constant 0 : index
    %22 = vector.load %arg8[%c0_17, %c0_18] : memref<1x32xf32, #tpu.memory_space<vmem>>, vector<1x32xf32>
    %23 = vector.broadcast %22 : vector<1x32xf32> to vector<128x32xf32>
    %24 = arith.mulf %21, %23 : vector<128x32xf32>
    %cst_19 = arith.constant dense<0.000000e+00> : vector<128xf32>
    %25 = vector.multi_reduction <add>, %24, %cst_19 [1] : vector<128x32xf32> to vector<128xf32>
    %26 = vector.shape_cast %25 : vector<128xf32> to vector<1x128xf32>
    %c0_20 = arith.constant 0 : index
    %27 = memref.load %arg9[%c0_20] : memref<1xf32, #tpu.memory_space<smem>>
    %28 = vector.broadcast %27 : f32 to vector<1x128xf32>
    %29 = arith.addf %26, %28 : vector<1x128xf32>
    %c0_21 = arith.constant 0 : index
    %c0_22 = arith.constant 0 : index
    %30 = vector.load %arg10[%c0_21, %c0_22] : memref<1x128xf32, #tpu.memory_space<vmem>>, vector<1x128xf32>
    tpu.vector_store %arg10[%c0_21, %c0_22], %29 {strides = array<i32>} : memref<1x128xf32, #tpu.memory_space<vmem>>, vector<1x128xf32>,
    return
  }
  func.func @transform_0(%arg0: i32) -> (i32, i32) {
    %c0_i32 = arith.constant 0 : i32
    %c0_i32_0 = arith.constant 0 : i32
    return %arg0, %c0_i32 : i32, i32
  }
  func.func @transform_1(%arg0: i32) -> (i32, i32) {
    %c0_i32 = arith.constant 0 : i32
    %c0_i32_0 = arith.constant 0 : i32
    return %arg0, %c0_i32 : i32, i32
  }
  func.func @transform_2(%arg0: i32) -> (i32, i32) {
    %c0_i32 = arith.constant 0 : i32
    %c0_i32_0 = arith.constant 0 : i32
    %c0_i32_1 = arith.constant 0 : i32
    return %c0_i32, %c0_i32_0 : i32, i32
  }
  func.func @transform_3(%arg0: i32) -> (i32, i32) {
    %c0_i32 = arith.constant 0 : i32
    %c0_i32_0 = arith.constant 0 : i32
    %c0_i32_1 = arith.constant 0 : i32
    return %c0_i32, %c0_i32_0 : i32, i32
  }
  func.func @transform_4(%arg0: i32) -> (i32, i32) {
    %c0_i32 = arith.constant 0 : i32
    %c0_i32_0 = arith.constant 0 : i32
    %c0_i32_1 = arith.constant 0 : i32
    return %c0_i32, %c0_i32_0 : i32, i32
  }
  func.func @transform_5(%arg0: i32) -> (i32, i32) {
    %c0_i32 = arith.constant 0 : i32
    %c0_i32_0 = arith.constant 0 : i32
    %c0_i32_1 = arith.constant 0 : i32
    return %c0_i32, %c0_i32_0 : i32, i32
  }
  func.func @transform_6(%arg0: i32) -> (i32, i32) {
    %c0_i32 = arith.constant 0 : i32
    %c0_i32_0 = arith.constant 0 : i32
    %c0_i32_1 = arith.constant 0 : i32
    return %c0_i32, %c0_i32_0 : i32, i32
  }
  func.func @transform_7(%arg0: i32) -> (i32, i32) {
    %c0_i32 = arith.constant 0 : i32
    %c0_i32_0 = arith.constant 0 : i32
    %c0_i32_1 = arith.constant 0 : i32
    return %c0_i32, %c0_i32_0 : i32, i32
  }
  func.func @transform_8(%arg0: i32) -> i32 {
    %c0_i32 = arith.constant 0 : i32
    %c0_i32_0 = arith.constant 0 : i32
    return %c0_i32 : i32
  }
  func.func @transform_9(%arg0: i32) -> (i32, i32) {
    %c0_i32 = arith.constant 0 : i32
    %c0_i32_0 = arith.constant 0 : i32
    return %c0_i32, %arg0 : i32, i32
  }
}

</mosaic_0001>

<llo_original>
// kernel: cem_agent_forward.1
$region0: #{cem_agent_forward.1}
  #allocation0 [shape = 'u32[]', space=smem, size = 0x4, offset = 0x4, fixed_abs, tag = 'smem constant byte address 0x4 - core index']
  #allocation1 [shape = 'u32[144,128]{1,0:T(1,128)}', space=vmem, size = 0x12000, scoped, tag = 'internal scratch']
  #allocation2 [shape = 'f32[1]{0:T(128)S(6)}', space=smem, size = 0x200, scoped, tag = 'scoped memory for cem_agent_forward.1']
  %s0 = inlined_call_operand.vmem [shape: f32[128,16], index: 0, kind: input, shape index: {}]
  %s1 = inlined_call_operand.vmem [shape: f32[128,4], index: 1, kind: input, shape index: {}]
  %s2 = inlined_call_operand.vmem [shape: bf16[16,32], index: 2, kind: input, shape index: {}]
  %s3 = inlined_call_operand.vmem [shape: bf16[4,32], index: 3, kind: input, shape index: {}]
  %s4 = inlined_call_operand.vmem [shape: f32[1,32], index: 4, kind: input, shape index: {}]
  %s5 = inlined_call_operand.vmem [shape: bf16[32,32], index: 5, kind: input, shape index: {}]
  %s6 = inlined_call_operand.vmem [shape: f32[1,32], index: 6, kind: input, shape index: {}]
  %s7 = inlined_call_operand.vmem [shape: f32[1,32], index: 7, kind: input, shape index: {}]
  %s8 = inlined_call_operand.<no memory space> [shape: f32[1], index: 8, kind: input, shape index: {}]
  %s9 = inlined_call_operand.vmem [shape: f32[1,128], index: 9, kind: output, shape index: {}]
  %s10 = sld [smem:[#allocation0]]
  $region46: #{cem_agent_forward.1} parent=0
    _
  %s12 = ssub.s32 1, %s10
  %s13 = scalar_select 0, %s12, %s10
  %14 = sst [smem:[#allocation2]] %s8
  // Predicated region
  $region2: #{cem_agent_forward.1} parent=0 // pred_check
    _
  $region3: #{cem_agent_forward.1} parent=0 // pred_check_branch
    %16 = sbr.rel (0) target = $region5
  $region4: #{cem_agent_forward.1} parent=0 // pred_region
    _
  $region5: #{cem_agent_forward.1} parent=0 // pred_fallthru
    _
  // Predicated region
  $region6: #{cem_agent_forward.1} parent=0 // pred_check
    _
  $region7: #{cem_agent_forward.1} parent=0 // pred_check_branch
    %18 = sbr.rel (0) target = $region9
  $region8: #{cem_agent_forward.1} parent=0 // pred_region
    _
  $region9: #{cem_agent_forward.1} parent=0 // pred_fallthru
    _
  // Predicated region
  $region10: #{cem_agent_forward.1} parent=0 // pred_check
    _
  $region11: #{cem_agent_forward.1} parent=0 // pred_check_branch
    %20 = sbr.rel (0) target = $region13
  $region12: #{cem_agent_forward.1} parent=0 // pred_region
    _
  $region13: #{cem_agent_forward.1} parent=0 // pred_fallthru
    _
  // Predicated region
  $region14: #{cem_agent_forward.1} parent=0 // pred_check
    _
  $region15: #{cem_agent_forward.1} parent=0 // pred_check_branch
    %22 = sbr.rel (0) target = $region17
  $region16: #{cem_agent_forward.1} parent=0 // pred_region
    _
  $region17: #{cem_agent_forward.1} parent=0 // pred_fallthru
    _
  // Predicated region
  $region18: #{cem_agent_forward.1} parent=0 // pred_check
    _
  $region19: #{cem_agent_forward.1} parent=0 // pred_check_branch
    %24 = sbr.rel (0) target = $region21
  $region20: #{cem_agent_forward.1} parent=0 // pred_region
    _
  $region21: #{cem_agent_forward.1} parent=0 // pred_fallthru
    _
  // Predicated region
  $region22: #{cem_agent_forward.1} parent=0 // pred_check
    _
  $region23: #{cem_agent_forward.1} parent=0 // pred_check_branch
    %26 = sbr.rel (0) target = $region25
  $region24: #{cem_agent_forward.1} parent=0 // pred_region
    _
  $region25: #{cem_agent_forward.1} parent=0 // pred_fallthru
    _
  // Predicated region
  $region26: #{cem_agent_forward.1} parent=0 // pred_check
    _
  $region27: #{cem_agent_forward.1} parent=0 // pred_check_branch
    %28 = sbr.rel (0) target = $region29
  $region28: #{cem_agent_forward.1} parent=0 // pred_region
    _
  $region29: #{cem_agent_forward.1} parent=0 // pred_fallthru
    _
  // Predicated region
  $region30: #{cem_agent_forward.1} parent=0 // pred_check
    _
  $region31: #{cem_agent_forward.1} parent=0 // pred_check_branch
    %30 = sbr.rel (0) target = $region33
  $region32: #{cem_agent_forward.1} parent=0 // pred_region
    _
  $region33: #{cem_agent_forward.1} parent=0 // pred_fallthru
    _
  // Predicated region
  $region34: #{cem_agent_forward.1} parent=0 // pred_check
    _
  $region35: #{cem_agent_forward.1} parent=0 // pred_check_branch
    %32 = sbr.rel (0) target = $region37
  $region36: #{cem_agent_forward.1} parent=0 // pred_region
    _
  $region37: #{cem_agent_forward.1} parent=0 // pred_fallthru
    _
  %v34 = vld [vmem:[%s0] sm:$0xff]
  %v35 = vld [vmem:[%s0 + $0x8] sm:$0xff]
  %v36 = vld [vmem:[%s0 + $0x10] sm:$0xff]
  %v37 = vld [vmem:[%s0 + $0x18] sm:$0xff]
  %v38 = vld [vmem:[%s0 + $0x20] sm:$0xff]
  %v39 = vld [vmem:[%s0 + $0x28] sm:$0xff]
  %v40 = vld [vmem:[%s0 + $0x30] sm:$0xff]
  %v41 = vld [vmem:[%s0 + $0x38] sm:$0xff]
  %v42 = vld [vmem:[%s0 + $0x40] sm:$0xff]
  %v43 = vld [vmem:[%s0 + $0x48] sm:$0xff]
  %v44 = vld [vmem:[%s0 + $0x50] sm:$0xff]
  %v45 = vld [vmem:[%s0 + $0x58] sm:$0xff]
  %v46 = vld [vmem:[%s0 + $0x60] sm:$0xff]
  %v47 = vld [vmem:[%s0 + $0x68] sm:$0xff]
  %v48 = vld [vmem:[%s0 + $0x70] sm:$0xff]
  %v49 = vld [vmem:[%s0 + $0x78] sm:$0xff]
  %v50 = vpack.c.bf16 %v35, %v34
  %v51 = vpack.c.bf16 %v37, %v36
  %v52 = vpack.c.bf16 %v39, %v38
  %v53 = vpack.c.bf16 %v41, %v40
  %v54 = vpack.c.bf16 %v43, %v42
  %v55 = vpack.c.bf16 %v45, %v44
  %v56 = vpack.c.bf16 %v47, %v46
  %v57 = vpack.c.bf16 %v49, %v48
  %v58 = vld [vmem:[%s1] sm:$0xff]
  %v59 = vld [vmem:[%s1 + $0x8] sm:$0xff]
  %v60 = vld [vmem:[%s1 + $0x10] sm:$0xff]
  %v61 = vld [vmem:[%s1 + $0x18] sm:$0xff]
  %v62 = vld [vmem:[%s1 + $0x20] sm:$0xff]
  %v63 = vld [vmem:[%s1 + $0x28] sm:$0xff]
  %v64 = vld [vmem:[%s1 + $0x30] sm:$0xff]
  %v65 = vld [vmem:[%s1 + $0x38] sm:$0xff]
  %v66 = vld [vmem:[%s1 + $0x40] sm:$0xff]
  %v67 = vld [vmem:[%s1 + $0x48] sm:$0xff]
  %v68 = vld [vmem:[%s1 + $0x50] sm:$0xff]
  %v69 = vld [vmem:[%s1 + $0x58] sm:$0xff]
  %v70 = vld [vmem:[%s1 + $0x60] sm:$0xff]
  %v71 = vld [vmem:[%s1 + $0x68] sm:$0xff]
  %v72 = vld [vmem:[%s1 + $0x70] sm:$0xff]
  %v73 = vld [vmem:[%s1 + $0x78] sm:$0xff]
  %v74 = vpack.c.bf16 %v59, %v58
  %v75 = vpack.c.bf16 %v61, %v60
  %v76 = vpack.c.bf16 %v63, %v62
  %v77 = vpack.c.bf16 %v65, %v64
  %v78 = vpack.c.bf16 %v67, %v66
  %v79 = vpack.c.bf16 %v69, %v68
  %v80 = vpack.c.bf16 %v71, %v70
  %v81 = vpack.c.bf16 %v73, %v72
  %v82 = vld [vmem:[%s2] sm:$0xf]
  %v83 = vld [vmem:[%s2 + $0x4] sm:$0xf]
  %v84 = vld [vmem:[%s3] sm:$0x3]
  %vm85 = vcmask 31744
  %v87 = vsel %vm85, %v74, 0
  %v90 = vsel %vm85, %v75, 0
  %v93 = vsel %vm85, %v76, 0
  %v96 = vsel %vm85, %v77, 0
  %v99 = vsel %vm85, %v78, 0
  %v102 = vsel %vm85, %v79, 0
  %v105 = vsel %vm85, %v80, 0
  %v108 = vsel %vm85, %v81, 0
  %vm110 = vcmask 1041408
  %v112 = vsel %vm110, %v84, 0
  %114 = vmatprep.subr.bf16.mxu0 0
  %115 = vmatpush1.bf16.msra.mxu0 %v112
  %116 = vmatprep.subr.bf16.mxu0 0
  %117 = vmatpush1.bf16.msra.mxu0 0
  %118 = vmatprep.subr.bf16.mxu0 0
  %119 = vmatpush1.bf16.msra.mxu0 0
  %120 = vmatprep.subr.bf16.mxu0 0
  %121 = vmatpush1.bf16.msra.mxu0 0
  %122 = vmatprep.subr.bf16.mxu0 0
  %123 = vmatpush1.bf16.msra.mxu0 0
  %124 = vmatprep.subr.bf16.mxu0 0
  %125 = vmatpush1.bf16.msra.mxu0 0
  %126 = vmatprep.subr.bf16.mxu0 0
  %127 = vmatpush1.bf16.msra.mxu0 0
  %128 = vmatprep.subr.bf16.mxu0 0
  %129 = vmatpush1.bf16.msra.mxu0 0
  %130 = vmatprep.subr.bf16.mxu0 0
  %131 = vmatpush1.bf16.msra.mxu0 0
  %132 = vmatprep.subr.bf16.mxu0 0
  %133 = vmatpush1.bf16.msra.mxu0 0
  %134 = vmatprep.subr.bf16.mxu0 0
  %135 = vmatpush1.bf16.msra.mxu0 0
  %136 = vmatprep.subr.bf16.mxu0 0
  %137 = vmatpush1.bf16.msra.mxu0 0
  %138 = vmatprep.subr.bf16.mxu0 0
  %139 = vmatpush1.bf16.msra.mxu0 0
  %140 = vmatprep.subr.bf16.mxu0 0
  %141 = vmatpush1.bf16.msra.mxu0 0
  %142 = vmatprep.subr.bf16.mxu0 0
  %143 = vmatpush1.bf16.msra.mxu0 0
  %144 = vmatprep.subr.bf16.mxu0 0
  %145 = vmatpush1.bf16.msra.mxu0 0
  %146 = vmatprep.mubr.bf16.mxu0 0
  %147 = vmatmul.mubr.bf16.gmra.mrb[0].mxu0 %v87
  %v148 = vpop.f32.mrb[0].mxu0
  %v149 = vadd.f32 0.0, %v148
  %v150 = vpop.f32.mrb[0].mxu0
  %v151 = vpop.f32.mrb[0].mxu0
  %v152 = vadd.f32 0.0, %v151
  %v153 = vpop.f32.mrb[0].mxu0
  %154 = vmatprep.mubr.bf16.mxu0 0
  %155 = vmatmul.mubr.bf16.gmra.mrb[0].mxu0 %v90
  %v156 = vpop.f32.mrb[0].mxu0
  %v157 = vadd.f32 0.0, %v156
  %v158 = vpop.f32.mrb[0].mxu0
  %v159 = vpop.f32.mrb[0].mxu0
  %v160 = vadd.f32 0.0, %v159
  %v161 = vpop.f32.mrb[0].mxu0
  %162 = vmatprep.mubr.bf16.mxu0 0
  %163 = vmatmul.mubr.bf16.gmra.mrb[0].mxu0 %v93
  %v164 = vpop.f32.mrb[0].mxu0
  %v165 = vadd.f32 0.0, %v164
  %v166 = vpop.f32.mrb[0].mxu0
  %v167 = vpop.f32.mrb[0].mxu0
  %v168 = vadd.f32 0.0, %v167
  %v169 = vpop.f32.mrb[0].mxu0
  %170 = vmatprep.mubr.bf16.mxu0 0
  %171 = vmatmul.mubr.bf16.gmra.mrb[0].mxu0 %v96
  %v172 = vpop.f32.mrb[0].mxu0
  %v173 = vadd.f32 0.0, %v172
  %v174 = vpop.f32.mrb[0].mxu0
  %v175 = vpop.f32.mrb[0].mxu0
  %v176 = vadd.f32 0.0, %v175
  %v177 = vpop.f32.mrb[0].mxu0
  %178 = vmatprep.mubr.bf16.mxu0 0
  %179 = vmatmul.mubr.bf16.gmra.mrb[0].mxu0 %v99
  %v180 = vpop.f32.mrb[0].mxu0
  %v181 = vadd.f32 0.0, %v180
  %v182 = vpop.f32.mrb[0].mxu0
  %v183 = vpop.f32.mrb[0].mxu0
  %v184 = vadd.f32 0.0, %v183
  %v185 = vpop.f32.mrb[0].mxu0
  %186 = vmatprep.mubr.bf16.mxu0 0
  %187 = vmatmul.mubr.bf16.gmra.mrb[0].mxu0 %v102
  %v188 = vpop.f32.mrb[0].mxu0
  %v189 = vadd.f32 0.0, %v188
  %v190 = vpop.f32.mrb[0].mxu0
  %v191 = vpop.f32.mrb[0].mxu0
  %v192 = vadd.f32 0.0, %v191
  %v193 = vpop.f32.mrb[0].mxu0
  %194 = vmatprep.mubr.bf16.mxu0 0
  %195 = vmatmul.mubr.bf16.gmra.mrb[0].mxu0 %v105
  %v196 = vpop.f32.mrb[0].mxu0
  %v197 = vadd.f32 0.0, %v196
  %v198 = vpop.f32.mrb[0].mxu0
  %v199 = vpop.f32.mrb[0].mxu0
  %v200 = vadd.f32 0.0, %v199
  %v201 = vpop.f32.mrb[0].mxu0
  %202 = vmatprep.mubr.bf16.mxu0 0
  %203 = vmatmul.mubr.bf16.gmra.mrb[0].mxu0 %v108
  %v204 = vpop.f32.mrb[0].mxu0
  %v205 = vadd.f32 0.0, %v204
  %v206 = vpop.f32.mrb[0].mxu0
  %v207 = vpop.f32.mrb[0].mxu0
  %v208 = vadd.f32 0.0, %v207
  %v209 = vpop.f32.mrb[0].mxu0
  %210 = vdwg.mxu0
  %v213 = vunpack.c.l.b16 %v82
  %v214 = vunpack.c.l.b16 %v83
  %v215 = vpack.c.b16 %v214, %v213
  %vm217 = vcmask 130048
  %v219 = vsel %vm217, %v50, 0
  %v222 = vsel %vm217, %v51, 0
  %v225 = vsel %vm217, %v52, 0
  %v228 = vsel %vm217, %v53, 0
  %v231 = vsel %vm217, %v54, 0
  %v234 = vsel %vm217, %v55, 0
  %v237 = vsel %vm217, %v56, 0
  %v240 = vsel %vm217, %v57, 0
  %242 = vmatprep.subr.bf16.mxu0 0
  %243 = vmatpush1.bf16.msra.mxu0 %v215
  %244 = vmatprep.subr.bf16.mxu0 0
  %245 = vmatpush1.bf16.msra.mxu0 0
  %246 = vmatprep.subr.bf16.mxu0 0
  %247 = vmatpush1.bf16.msra.mxu0 0
  %248 = vmatprep.subr.bf16.mxu0 0
  %249 = vmatpush1.bf16.msra.mxu0 0
  %250 = vmatprep.subr.bf16.mxu0 0
  %251 = vmatpush1.bf16.msra.mxu0 0
  %252 = vmatprep.subr.bf16.mxu0 0
  %253 = vmatpush1.bf16.msra.mxu0 0
  %254 = vmatprep.subr.bf16.mxu0 0
  %255 = vmatpush1.bf16.msra.mxu0 0
  %256 = vmatprep.subr.bf16.mxu0 0
  %257 = vmatpush1.bf16.msra.mxu0 0
  %258 = vmatprep.subr.bf16.mxu0 0
  %259 = vmatpush1.bf16.msra.mxu0 0
  %260 = vmatprep.subr.bf16.mxu0 0
  %261 = vmatpush1.bf16.msra.mxu0 0
  %262 = vmatprep.subr.bf16.mxu0 0
  %263 = vmatpush1.bf16.msra.mxu0 0
  %264 = vmatprep.subr.bf16.mxu0 0
  %265 = vmatpush1.bf16.msra.mxu0 0
  %266 = vmatprep.subr.bf16.mxu0 0
  %267 = vmatpush1.bf16.msra.mxu0 0
  %268 = vmatprep.subr.bf16.mxu0 0
  %269 = vmatpush1.bf16.msra.mxu0 0
  %270 = vmatprep.subr.bf16.mxu0 0
  %271 = vmatpush1.bf16.msra.mxu0 0
  %272 = vmatprep.subr.bf16.mxu0 0
  %273 = vmatpush1.bf16.msra.mxu0 0
  %274 = vmatprep.mubr.bf16.mxu0 0
  %275 = vmatmul.mubr.bf16.gmra.mrb[0].mxu0 %v219
  %v276 = vpop.f32.mrb[0].mxu0
  %v277 = vadd.f32 %v149, %v276
  %v278 = vpop.f32.mrb[0].mxu0
  %v279 = vpop.f32.mrb[0].mxu0
  %v280 = vadd.f32 %v152, %v279
  %v281 = vpop.f32.mrb[0].mxu0
  %282 = vmatprep.mubr.bf16.mxu0 0
  %283 = vmatmul.mubr.bf16.gmra.mrb[0].mxu0 %v222
  %v284 = vpop.f32.mrb[0].mxu0
  %v285 = vadd.f32 %v157, %v284
  %v286 = vpop.f32.mrb[0].mxu0
  %v287 = vpop.f32.mrb[0].mxu0
  %v288 = vadd.f32 %v160, %v287
  %v289 = vpop.f32.mrb[0].mxu0
  %290 = vmatprep.mubr.bf16.mxu0 0
  %291 = vmatmul.mubr.bf16.gmra.mrb[0].mxu0 %v225
  %v292 = vpop.f32.mrb[0].mxu0
  %v293 = vadd.f32 %v165, %v292
  %v294 = vpop.f32.mrb[0].mxu0
  %v295 = vpop.f32.mrb[0].mxu0
  %v296 = vadd.f32 %v168, %v295
  %v297 = vpop.f32.mrb[0].mxu0
  %298 = vmatprep.mubr.bf16.mxu0 0
  %299 = vmatmul.mubr.bf16.gmra.mrb[0].mxu0 %v228
  %v300 = vpop.f32.mrb[0].mxu0
  %v301 = vadd.f32 %v173, %v300
  %v302 = vpop.f32.mrb[0].mxu0
  %v303 = vpop.f32.mrb[0].mxu0
  %v304 = vadd.f32 %v176, %v303
  %v305 = vpop.f32.mrb[0].mxu0
  %306 = vmatprep.mubr.bf16.mxu0 0
  %307 = vmatmul.mubr.bf16.gmra.mrb[0].mxu0 %v231
  %v308 = vpop.f32.mrb[0].mxu0
  %v309 = vadd.f32 %v181, %v308
  %v310 = vpop.f32.mrb[0].mxu0
  %v311 = vpop.f32.mrb[0].mxu0
  %v312 = vadd.f32 %v184, %v311
  %v313 = vpop.f32.mrb[0].mxu0
  %314 = vmatprep.mubr.bf16.mxu0 0
  %315 = vmatmul.mubr.bf16.gmra.mrb[0].mxu0 %v234
  %v316 = vpop.f32.mrb[0].mxu0
  %v317 = vadd.f32 %v189, %v316
  %v318 = vpop.f32.mrb[0].mxu0
  %v319 = vpop.f32.mrb[0].mxu0
  %v320 = vadd.f32 %v192, %v319
  %v321 = vpop.f32.mrb[0].mxu0
  %322 = vmatprep.mubr.bf16.mxu0 0
  %323 = vmatmul.mubr.bf16.gmra.mrb[0].mxu0 %v237
  %v324 = vpop.f32.mrb[0].mxu0
  %v325 = vadd.f32 %v197, %v324
  %v326 = vpop.f32.mrb[0].mxu0
  %v327 = vpop.f32.mrb[0].mxu0
  %v328 = vadd.f32 %v200, %v327
  %v329 = vpop.f32.mrb[0].mxu0
  %330 = vmatprep.mubr.bf16.mxu0 0
  %331 = vmatmul.mubr.bf16.gmra.mrb[0].mxu0 %v240
  %v332 = vpop.f32.mrb[0].mxu0
  %v333 = vadd.f32 %v205, %v332
  %v334 = vpop.f32.mrb[0].mxu0
  %v335 = vpop.f32.mrb[0].mxu0
  %v336 = vadd.f32 %v208, %v335
  %v337 = vpop.f32.mrb[0].mxu0
  %338 = vdwg.mxu0
  %v339 = vld [vmem:[%s4] sm:$0x1]
  %v341 = vlaneseq
  %v342 = vshrl.u32 %v341, 7
  %v343 = vsub.s32 0, %v342
  %v344 = vrot.slane %v339, %v343
  %v346 = vadd.f32 %v277, %v344
  %v347 = vadd.f32 %v280, %v344
  %v348 = vadd.f32 %v285, %v344
  %v349 = vadd.f32 %v288, %v344
  %v350 = vadd.f32 %v293, %v344
  %v351 = vadd.f32 %v296, %v344
  %v352 = vadd.f32 %v301, %v344
  %v353 = vadd.f32 %v304, %v344
  %v354 = vadd.f32 %v309, %v344
  %v355 = vadd.f32 %v312, %v344
  %v356 = vadd.f32 %v317, %v344
  %v357 = vadd.f32 %v320, %v344
  %v358 = vadd.f32 %v325, %v344
  %v359 = vadd.f32 %v328, %v344
  %v360 = vadd.f32 %v333, %v344
  %v361 = vadd.f32 %v336, %v344
  %v362 = vmax.f32 %v346, 0.0
  %v363 = vmax.f32 %v347, 0.0
  %v364 = vmax.f32 %v348, 0.0
  %v365 = vmax.f32 %v349, 0.0
  %v366 = vmax.f32 %v350, 0.0
  %v367 = vmax.f32 %v351, 0.0
  %v368 = vmax.f32 %v352, 0.0
  %v369 = vmax.f32 %v353, 0.0
  %v370 = vmax.f32 %v354, 0.0
  %v371 = vmax.f32 %v355, 0.0
  %v372 = vmax.f32 %v356, 0.0
  %v373 = vmax.f32 %v357, 0.0
  %v374 = vmax.f32 %v358, 0.0
  %v375 = vmax.f32 %v359, 0.0
  %v376 = vmax.f32 %v360, 0.0
  %v377 = vmax.f32 %v361, 0.0
  %v378 = vpack.c.bf16 %v363, %v362
  %v379 = vpack.c.bf16 %v365, %v364
  %v380 = vpack.c.bf16 %v367, %v366
  %v381 = vpack.c.bf16 %v369, %v368
  %v382 = vpack.c.bf16 %v371, %v370
  %v383 = vpack.c.bf16 %v373, %v372
  %v384 = vpack.c.bf16 %v375, %v374
  %v385 = vpack.c.bf16 %v377, %v376
  %v386 = vld [vmem:[%s5] sm:$0xf]
  %v387 = vld [vmem:[%s5 + $0x4] sm:$0xf]
  %v388 = vld [vmem:[%s5 + $0x8] sm:$0xf]
  %v389 = vld [vmem:[%s5 + $0xc] sm:$0xf]
  %v390 = vld [vmem:[%s6] sm:$0x1]
  %v392 = vlaneseq
  %v393 = vshrl.u32 %v392, 7
  %v394 = vsub.s32 0, %v393
  %v395 = vrot.slane %v390, %v394
  %v401 = vunpack.c.l.b16 %v386
  %v402 = vunpack.c.l.b16 %v387
  %v403 = vunpack.c.l.b16 %v388
  %v404 = vunpack.c.l.b16 %v389
  %v405 = vpack.c.b16 %v402, %v401
  %v406 = vpack.c.b16 %v404, %v403
  %vm409 = vcmask 261120
  %v411 = vsel %vm409, %v378, 0
  %v414 = vsel %vm409, %v379, 0
  %v417 = vsel %vm409, %v380, 0
  %v420 = vsel %vm409, %v381, 0
  %v423 = vsel %vm409, %v382, 0
  %v426 = vsel %vm409, %v383, 0
  %v429 = vsel %vm409, %v384, 0
  %v432 = vsel %vm409, %v385, 0
  %434 = vmatprep.subr.bf16.mxu0 0
  %435 = vmatpush1.bf16.msra.mxu0 %v405
  %436 = vmatprep.subr.bf16.mxu0 0
  %437 = vmatpush1.bf16.msra.mxu0 %v406
  %438 = vmatprep.subr.bf16.mxu0 0
  %439 = vmatpush1.bf16.msra.mxu0 0
  %440 = vmatprep.subr.bf16.mxu0 0
  %441 = vmatpush1.bf16.msra.mxu0 0
  %442 = vmatprep.subr.bf16.mxu0 0
  %443 = vmatpush1.bf16.msra.mxu0 0
  %444 = vmatprep.subr.bf16.mxu0 0
  %445 = vmatpush1.bf16.msra.mxu0 0
  %446 = vmatprep.subr.bf16.mxu0 0
  %447 = vmatpush1.bf16.msra.mxu0 0
  %448 = vmatprep.subr.bf16.mxu0 0
  %449 = vmatpush1.bf16.msra.mxu0 0
  %450 = vmatprep.subr.bf16.mxu0 0
  %451 = vmatpush1.bf16.msra.mxu0 0
  %452 = vmatprep.subr.bf16.mxu0 0
  %453 = vmatpush1.bf16.msra.mxu0 0
  %454 = vmatprep.subr.bf16.mxu0 0
  %455 = vmatpush1.bf16.msra.mxu0 0
  %456 = vmatprep.subr.bf16.mxu0 0
  %457 = vmatpush1.bf16.msra.mxu0 0
  %458 = vmatprep.subr.bf16.mxu0 0
  %459 = vmatpush1.bf16.msra.mxu0 0
  %460 = vmatprep.subr.bf16.mxu0 0
  %461 = vmatpush1.bf16.msra.mxu0 0
  %462 = vmatprep.subr.bf16.mxu0 0
  %463 = vmatpush1.bf16.msra.mxu0 0
  %464 = vmatprep.subr.bf16.mxu0 0
  %465 = vmatpush1.bf16.msra.mxu0 0
  %466 = vmatprep.mubr.bf16.mxu0 0
  %467 = vmatmul.mubr.bf16.gmra.mrb[0].mxu0 %v411
  %v468 = vpop.f32.mrb[0].mxu0
  %v469 = vadd.f32 %v395, %v468
  %v470 = vpop.f32.mrb[0].mxu0
  %v471 = vpop.f32.mrb[0].mxu0
  %v472 = vadd.f32 %v395, %v471
  %v473 = vpop.f32.mrb[0].mxu0
  %474 = vmatprep.mubr.bf16.mxu0 0
  %475 = vmatmul.mubr.bf16.gmra.mrb[0].mxu0 %v414
  %v476 = vpop.f32.mrb[0].mxu0
  %v477 = vadd.f32 %v395, %v476
  %v478 = vpop.f32.mrb[0].mxu0
  %v479 = vpop.f32.mrb[0].mxu0
  %v480 = vadd.f32 %v395, %v479
  %v481 = vpop.f32.mrb[0].mxu0
  %482 = vmatprep.mubr.bf16.mxu0 0
  %483 = vmatmul.mubr.bf16.gmra.mrb[0].mxu0 %v417
  %v484 = vpop.f32.mrb[0].mxu0
  %v485 = vadd.f32 %v395, %v484
  %v486 = vpop.f32.mrb[0].mxu0
  %v487 = vpop.f32.mrb[0].mxu0
  %v488 = vadd.f32 %v395, %v487
  %v489 = vpop.f32.mrb[0].mxu0
  %490 = vmatprep.mubr.bf16.mxu0 0
  %491 = vmatmul.mubr.bf16.gmra.mrb[0].mxu0 %v420
  %v492 = vpop.f32.mrb[0].mxu0
  %v493 = vadd.f32 %v395, %v492
  %v494 = vpop.f32.mrb[0].mxu0
  %v495 = vpop.f32.mrb[0].mxu0
  %v496 = vadd.f32 %v395, %v495
  %v497 = vpop.f32.mrb[0].mxu0
  %498 = vmatprep.mubr.bf16.mxu0 0
  %499 = vmatmul.mubr.bf16.gmra.mrb[0].mxu0 %v423
  %v500 = vpop.f32.mrb[0].mxu0
  %v501 = vadd.f32 %v395, %v500
  %v502 = vpop.f32.mrb[0].mxu0
  %v503 = vpop.f32.mrb[0].mxu0
  %v504 = vadd.f32 %v395, %v503
  %v505 = vpop.f32.mrb[0].mxu0
  %506 = vmatprep.mubr.bf16.mxu0 0
  %507 = vmatmul.mubr.bf16.gmra.mrb[0].mxu0 %v426
  %v508 = vpop.f32.mrb[0].mxu0
  %v509 = vadd.f32 %v395, %v508
  %v510 = vpop.f32.mrb[0].mxu0
  %v511 = vpop.f32.mrb[0].mxu0
  %v512 = vadd.f32 %v395, %v511
  %v513 = vpop.f32.mrb[0].mxu0
  %514 = vmatprep.mubr.bf16.mxu0 0
  %515 = vmatmul.mubr.bf16.gmra.mrb[0].mxu0 %v429
  %v516 = vpop.f32.mrb[0].mxu0
  %v517 = vadd.f32 %v395, %v516
  %v518 = vpop.f32.mrb[0].mxu0
  %v519 = vpop.f32.mrb[0].mxu0
  %v520 = vadd.f32 %v395, %v519
  %v521 = vpop.f32.mrb[0].mxu0
  %522 = vmatprep.mubr.bf16.mxu0 0
  %523 = vmatmul.mubr.bf16.gmra.mrb[0].mxu0 %v432
  %v524 = vpop.f32.mrb[0].mxu0
  %v525 = vadd.f32 %v395, %v524
  %v526 = vpop.f32.mrb[0].mxu0
  %v527 = vpop.f32.mrb[0].mxu0
  %v528 = vadd.f32 %v395, %v527
  %v529 = vpop.f32.mrb[0].mxu0
  %530 = vdwg.mxu0
  %v531 = vmax.f32 %v469, 0.0
  %v532 = vmax.f32 %v472, 0.0
  %v533 = vmax.f32 %v477, 0.0
  %v534 = vmax.f32 %v480, 0.0
  %v535 = vmax.f32 %v485, 0.0
  %v536 = vmax.f32 %v488, 0.0
  %v537 = vmax.f32 %v493, 0.0
  %v538 = vmax.f32 %v496, 0.0
  %v539 = vmax.f32 %v501, 0.0
  %v540 = vmax.f32 %v504, 0.0
  %v541 = vmax.f32 %v509, 0.0
  %v542 = vmax.f32 %v512, 0.0
  %v543 = vmax.f32 %v517, 0.0
  %v544 = vmax.f32 %v520, 0.0
  %v545 = vmax.f32 %v525, 0.0
  %v546 = vmax.f32 %v528, 0.0
  %v547 = vld [vmem:[%s7] sm:$0x1]
  %v549 = vlaneseq
  %v550 = vshrl.u32 %v549, 7
  %v551 = vsub.s32 0, %v550
  %v552 = vrot.slane %v547, %v551
  %v554 = vmul.f32 %v531, %v552
  %v555 = vmul.f32 %v532, %v552
  %v556 = vmul.f32 %v533, %v552
  %v557 = vmul.f32 %v534, %v552
  %v558 = vmul.f32 %v535, %v552
  %v559 = vmul.f32 %v536, %v552
  %v560 = vmul.f32 %v537, %v552
  %v561 = vmul.f32 %v538, %v552
  %v562 = vmul.f32 %v539, %v552
  %v563 = vmul.f32 %v540, %v552
  %v564 = vmul.f32 %v541, %v552
  %v565 = vmul.f32 %v542, %v552
  %v566 = vmul.f32 %v543, %v552
  %v567 = vmul.f32 %v544, %v552
  %v568 = vmul.f32 %v545, %v552
  %v569 = vmul.f32 %v546, %v552
  %v570 = vsel %vm409, %v554, 0.0
  %571 = vadd.xlane.f32.xlu0 %v570
  %v572 = vpop.xlane.xlu0 %571
  %v573 = vsel %vm409, %v555, 0.0
  %574 = vadd.xlane.f32.xlu0 %v573
  %v575 = vpop.xlane.xlu0 %574
  %v576 = vsel %vm409, %v556, 0.0
  %577 = vadd.xlane.f32.xlu0 %v576
  %v578 = vpop.xlane.xlu0 %577
  %v579 = vsel %vm409, %v557, 0.0
  %580 = vadd.xlane.f32.xlu0 %v579
  %v581 = vpop.xlane.xlu0 %580
  %v582 = vsel %vm409, %v558, 0.0
  %583 = vadd.xlane.f32.xlu0 %v582
  %v584 = vpop.xlane.xlu0 %583
  %v585 = vsel %vm409, %v559, 0.0
  %586 = vadd.xlane.f32.xlu0 %v585
  %v587 = vpop.xlane.xlu0 %586
  %v588 = vsel %vm409, %v560, 0.0
  %589 = vadd.xlane.f32.xlu0 %v588
  %v590 = vpop.xlane.xlu0 %589
  %v591 = vsel %vm409, %v561, 0.0
  %592 = vadd.xlane.f32.xlu0 %v591
  %v593 = vpop.xlane.xlu0 %592
  %v594 = vsel %vm409, %v562, 0.0
  %595 = vadd.xlane.f32.xlu0 %v594
  %v596 = vpop.xlane.xlu0 %595
  %v597 = vsel %vm409, %v563, 0.0
  %598 = vadd.xlane.f32.xlu0 %v597
  %v599 = vpop.xlane.xlu0 %598
  %v600 = vsel %vm409, %v564, 0.0
  %601 = vadd.xlane.f32.xlu0 %v600
  %v602 = vpop.xlane.xlu0 %601
  %v603 = vsel %vm409, %v565, 0.0
  %604 = vadd.xlane.f32.xlu0 %v603
  %v605 = vpop.xlane.xlu0 %604
  %v606 = vsel %vm409, %v566, 0.0
  %607 = vadd.xlane.f32.xlu0 %v606
  %v608 = vpop.xlane.xlu0 %607
  %v609 = vsel %vm409, %v567, 0.0
  %610 = vadd.xlane.f32.xlu0 %v609
  %v611 = vpop.xlane.xlu0 %610
  %v612 = vsel %vm409, %v568, 0.0
  %613 = vadd.xlane.f32.xlu0 %v612
  %v614 = vpop.xlane.xlu0 %613
  %v615 = vsel %vm409, %v569, 0.0
  %616 = vadd.xlane.f32.xlu0 %v615
  %v617 = vpop.xlane.xlu0 %616
  %s618 = sld [smem:[#allocation2]]
  %v619 = vstv %s618
  %v620 = vadd.f32 %v572, %v619
  %v621 = vadd.f32 %v575, %v619
  %v622 = vadd.f32 %v578, %v619
  %v623 = vadd.f32 %v581, %v619
  %v624 = vadd.f32 %v584, %v619
  %v625 = vadd.f32 %v587, %v619
  %v626 = vadd.f32 %v590, %v619
  %v627 = vadd.f32 %v593, %v619
  %v628 = vadd.f32 %v596, %v619
  %v629 = vadd.f32 %v599, %v619
  %v630 = vadd.f32 %v602, %v619
  %v631 = vadd.f32 %v605, %v619
  %v632 = vadd.f32 %v608, %v619
  %v633 = vadd.f32 %v611, %v619
  %v634 = vadd.f32 %v614, %v619
  %v635 = vadd.f32 %v617, %v619
  %v652 = vlaneseq
  %v653 = vand.u32 %v652, 127
  %v654 = vlaneseq
  %v655 = vshrl.u32 %v654, 7
  %v656 = vsub.s32 %v653, %v655
  %v657 = vrot.slane %v620, %v656
  %v658 = vadd.s32 %v653, 4294967288
  %v659 = vlaneseq
  %v660 = vshrl.u32 %v659, 7
  %v661 = vsub.s32 %v658, %v660
  %v662 = vrot.slane %v621, %v661
  %vm663 = vcmask 130112
  %v664 = vsel %vm663, %v662, %v657
  %v665 = vadd.s32 %v653, 4294967280
  %v666 = vlaneseq
  %v667 = vshrl.u32 %v666, 7
  %v668 = vsub.s32 %v665, %v667
  %v669 = vrot.slane %v622, %v668
  %vm670 = vcmask 195712
  %v671 = vsel %vm670, %v669, %v664
  %v672 = vadd.s32 %v653, 4294967272
  %v673 = vlaneseq
  %v674 = vshrl.u32 %v673, 7
  %v675 = vsub.s32 %v672, %v674
  %v676 = vrot.slane %v623, %v675
  %vm677 = vcmask 261312
  %v678 = vsel %vm677, %v676, %v671
  %v679 = vadd.s32 %v653, 4294967264
  %v680 = vlaneseq
  %v681 = vshrl.u32 %v680, 7
  %v682 = vsub.s32 %v679, %v681
  %v683 = vrot.slane %v624, %v682
  %vm684 = vcmask 326912
  %v685 = vsel %vm684, %v683, %v678
  %v686 = vadd.s32 %v653, 4294967256
  %v687 = vlaneseq
  %v688 = vshrl.u32 %v687, 7
  %v689 = vsub.s32 %v686, %v688
  %v690 = vrot.slane %v625, %v689
  %vm691 = vcmask 392512
  %v692 = vsel %vm691, %v690, %v685
  %v693 = vadd.s32 %v653, 4294967248
  %v694 = vlaneseq
  %v695 = vshrl.u32 %v694, 7
  %v696 = vsub.s32 %v693, %v695
  %v697 = vrot.slane %v626, %v696
  %vm698 = vcmask 458112
  %v699 = vsel %vm698, %v697, %v692
  %v700 = vadd.s32 %v653, 4294967240
  %v701 = vlaneseq
  %v702 = vshrl.u32 %v701, 7
  %v703 = vsub.s32 %v700, %v702
  %v704 = vrot.slane %v627, %v703
  %vm705 = vcmask 523712
  %v706 = vsel %vm705, %v704, %v699
  %v707 = vadd.s32 %v653, 4294967232
  %v708 = vlaneseq
  %v709 = vshrl.u32 %v708, 7
  %v710 = vsub.s32 %v707, %v709
  %v711 = vrot.slane %v628, %v710
  %vm712 = vcmask 589312
  %v713 = vsel %vm712, %v711, %v706
  %v714 = vadd.s32 %v653, 4294967224
  %v715 = vlaneseq
  %v716 = vshrl.u32 %v715, 7
  %v717 = vsub.s32 %v714, %v716
  %v718 = vrot.slane %v629, %v717
  %vm719 = vcmask 654912
  %v720 = vsel %vm719, %v718, %v713
  %v721 = vadd.s32 %v653, 4294967216
  %v722 = vlaneseq
  %v723 = vshrl.u32 %v722, 7
  %v724 = vsub.s32 %v721, %v723
  %v725 = vrot.slane %v630, %v724
  %vm726 = vcmask 720512
  %v727 = vsel %vm726, %v725, %v720
  %v728 = vadd.s32 %v653, 4294967208
  %v729 = vlaneseq
  %v730 = vshrl.u32 %v729, 7
  %v731 = vsub.s32 %v728, %v730
  %v732 = vrot.slane %v631, %v731
  %vm733 = vcmask 786112
  %v734 = vsel %vm733, %v732, %v727
  %v735 = vadd.s32 %v653, 4294967200
  %v736 = vlaneseq
  %v737 = vshrl.u32 %v736, 7
  %v738 = vsub.s32 %v735, %v737
  %v739 = vrot.slane %v632, %v738
  %vm740 = vcmask 851712
  %v741 = vsel %vm740, %v739, %v734
  %v742 = vadd.s32 %v653, 4294967192
  %v743 = vlaneseq
  %v744 = vshrl.u32 %v743, 7
  %v745 = vsub.s32 %v742, %v744
  %v746 = vrot.slane %v633, %v745
  %vm747 = vcmask 917312
  %v748 = vsel %vm747, %v746, %v741
  %v749 = vadd.s32 %v653, 4294967184
  %v750 = vlaneseq
  %v751 = vshrl.u32 %v750, 7
  %v752 = vsub.s32 %v749, %v751
  %v753 = vrot.slane %v634, %v752
  %vm754 = vcmask 982912
  %v755 = vsel %vm754, %v753, %v748
  %v756 = vadd.s32 %v653, 4294967176
  %v757 = vlaneseq
  %v758 = vshrl.u32 %v757, 7
  %v759 = vsub.s32 %v756, %v758
  %v760 = vrot.slane %v635, %v759
  %vm761 = vcmask 1048512
  %v762 = vsel %vm761, %v760, %v755
  %764 = vst [vmem:[%s9] sm:$0x1] %v762
  // Predicated region
  $region38: #{cem_agent_forward.1} parent=0 // pred_check
    _
  $region39: #{cem_agent_forward.1} parent=0 // pred_check_branch
    %766 = sbr.rel (0) target = $region41
  $region40: #{cem_agent_forward.1} parent=0 // pred_region
    _
  $region41: #{cem_agent_forward.1} parent=0 // pred_fallthru
    _
  // Predicated region
  $region42: #{cem_agent_forward.1} parent=0 // pred_check
    _
  $region43: #{cem_agent_forward.1} parent=0 // pred_check_branch
    %768 = sbr.rel (0) target = $region45
  $region44: #{cem_agent_forward.1} parent=0 // pred_region
    _
  $region45: #{cem_agent_forward.1} parent=0 // pred_fallthru
    _

</llo_original>
